<compile_context>
chip_gen: v7x
topology: tpu7x:2x2x1
jax: 0.10.0
libtpu: 0.0.40
codegen_flags: <defaults>
</compile_context>

<pallas_src>
import functools
import math

import jax
import jax.numpy as jnp
from jax.experimental import pallas as pl
from jax.experimental.pallas import tpu as pltpu


def _round_up(v, m):
    return ((v + m - 1) // m) * m


def _pad2d(a, rows, cols):
    return jnp.pad(a, ((0, rows - a.shape[0]), (0, cols - a.shape[1])))


def _fcnet_fused_kernel(x_ref, w0_ref, b0_ref, wr_ref, br_ref, o_ref):
    # x_ref : (TM, K0p)    input dtype (f32); cast to bf16 in-kernel
    # w0_ref: (K0p, Hp)    bf16
    # b0_ref: (1, Hp)      f32
    # wr_ref: (L, Hp, Hp)  bf16   (hidden layers + classifier, packed)
    # br_ref: (L, 1, Hp)   f32
    # o_ref : (TM, Hp)     f32    (doubles as the resident activation buffer)
    x = x_ref[...].astype(w0_ref.dtype)
    acc = jnp.dot(x, w0_ref[...], preferred_element_type=jnp.float32)
    o_ref[...] = jnp.maximum(acc + b0_ref[...], 0.0)
    # Small, static layer count -> unrolled loop.  The activation tile never
    # leaves VMEM between layers; o_ref is only written back to HBM once per
    # tile when the grid step completes.  Zero-padded feature columns stay
    # zero through every layer because padded weight rows/cols and biases are
    # zero and relu(0 + 0) = 0.
    for l in range(wr_ref.shape[0]):
        acc = jnp.dot(o_ref[...].astype(wr_ref.dtype), wr_ref[l],
                      preferred_element_type=jnp.float32)
        o_ref[...] = jnp.maximum(acc + br_ref[l], 0.0)


@functools.partial(jax.jit, static_argnames=("num_classes",))
def _fcnet_forward(x, w0, b0, wr, br, *, num_classes):
    """x: (B, C, H, W) NCHW. Returns (B, num_classes) f32."""
    B = x.shape[0]
    x = x.reshape(B, -1)
    K0 = x.shape[1]
    K0p, Hp = w0.shape
    L = wr.shape[0]

    # --- batch tiling -------------------------------------------------------
    # Multiple of 16 (bf16 sublane packing).  Aim for ~half the rounded batch
    # so there are >= 2 grid steps (megacore sharding on v7x) whenever the
    # batch is non-trivial; cap at 512 so the per-step x tile stays a few MiB.
    B16 = _round_up(B, 16)
    TM = min(_round_up(pl.cdiv(B16, 2), 16), 512)
    Mp = _round_up(B, TM)

    # Pad only when actually required (ragged last batch tile and/or K0 not a
    # multiple of 128); otherwise x flows straight into the kernel untouched
    # and the bf16 cast happens in-kernel (no extra HBM pad/cast pass).
    # Padded batch rows are sliced off below; rows are independent in a
    # matmul so they cannot pollute valid outputs.
    pad_rows = Mp - B
    pad_cols = K0p - K0
    if pad_rows or pad_cols:
        x = jnp.pad(x, ((0, pad_rows), (0, pad_cols)))

    out = pl.pallas_call(
        _fcnet_fused_kernel,
        out_shape=jax.ShapeDtypeStruct((Mp, Hp), jnp.float32),
        grid_spec=pltpu.PrefetchScalarGridSpec(
            num_scalar_prefetch=0,
            grid=(Mp // TM,),
            in_specs=[
                pl.BlockSpec((TM, K0p), lambda i: (i, 0)),        # activations
                pl.BlockSpec((K0p, Hp), lambda i: (0, 0)),        # layer-0 W
                pl.BlockSpec((1, Hp), lambda i: (0, 0)),          # layer-0 b
                pl.BlockSpec((L, Hp, Hp), lambda i: (0, 0, 0)),   # packed W
                pl.BlockSpec((L, 1, Hp), lambda i: (0, 0, 0)),    # packed b
            ],
            out_specs=pl.BlockSpec((TM, Hp), lambda i: (i, 0)),   # lane-dense
        ),
        compiler_params=pltpu.CompilerParams(
            dimension_semantics=("parallel",)),  # batch tiles shard across TCs on v7x
    )(x, w0, b0, wr, br)

    # NOTE: once fan-in K0p reaches ~10-20K at TM=128 (sooner at larger TM),
    # the double-buffered x tile + resident W0 (~2*(TM+Hp)*K0p*2 bytes)
    # approaches the scoped VMEM limit (32 MiB default; v7x has only 64 MiB
    # physical): add a K grid axis (last, "arbitrary") with an f32 VMEM
    # accumulator (pl.when init/finalize), single-buffer the constant weights
    # (pipeline_mode=pl.Buffered(1) or explicit VMEM staging), and raise
    # vmem_limit_bytes.  Not needed at these model sizes.
    return out[:B, :num_classes]


class FCNetPallas:
    """JAX/Pallas port of FCNet. Parameters initialized like nn.Linear
    (uniform +/- 1/sqrt(fan_in)) with deterministic JAX PRNG keys.
    Weights stored as (in, out) = transpose of torch's (out, in)."""

    def __init__(self, input_size, channels, num_layers, layer_size, classes,
                 key, compute_dtype=jnp.bfloat16):
        assert input_size > 1 and channels >= 1 and num_layers > 1
        assert layer_size > 1 and classes > 1
        self.input_size = input_size
        self.input_channels = channels
        self.num_layers = num_layers
        self.layer_size = layer_size
        self._num_classes = classes
        self.compute_dtype = compute_dtype

        d0 = input_size ** 2 * channels
        dims = [d0] + [layer_size] * num_layers + [classes]

        # Unpadded f32 master copies (reference checks / export).
        self.weights = []
        self.biases = []
        for i in range(len(dims) - 1):
            fan_in, fan_out = dims[i], dims[i + 1]
            key, kw, kb = jax.random.split(key, 3)
            bound = 1.0 / math.sqrt(fan_in)
            w = jax.random.uniform(kw, (fan_in, fan_out), jnp.float32, -bound, bound)
            b = jax.random.uniform(kb, (fan_out,), jnp.float32, -bound, bound)
            self.weights.append(w)
            self.biases.append(b)

        # ---- Pre-pad / pack / cast ONCE (not per forward) ----
        Hp = max(_round_up(layer_size, 128), _round_up(classes, 128))
        K0p = _round_up(d0, 128)
        self._hidden_pad = Hp

        self.w0 = _pad2d(self.weights[0], K0p, Hp).astype(compute_dtype)
        self.b0 = jnp.pad(self.biases[0], (0, Hp - self.biases[0].shape[0])
                          ).reshape(1, Hp).astype(jnp.float32)

        wr = [_pad2d(w, Hp, Hp) for w in self.weights[1:]]
        br = [jnp.pad(b, (0, Hp - b.shape[0])).reshape(1, Hp)
              for b in self.biases[1:]]
        self.wr = jnp.stack(wr).astype(compute_dtype)          # (L, Hp, Hp)
        self.br = jnp.stack(br).astype(jnp.float32)            # (L, 1, Hp)

        # TODO(synk): for MXU-bound sizes (layer_size >= 512), quantize the
        # resident weights per-generation (int8 on v5e/v6e, fp8 on v7x); the
        # bf16 path here is the portable default.

    @property
    def number_of_classes(self):
        return self._num_classes

    def __call__(self, x):
        # x: (B, C, H, W) NCHW, matching PyTorch.
        return _fcnet_forward(x, self.w0, self.b0, self.wr, self.br,
                              num_classes=self._num_classes)


if __name__ == "__main__":
    key = jax.random.PRNGKey(0)
    k_param, k_x = jax.random.split(key)

    # Small shapes consistent with the module: input_size=16, channels=4,
    # num_layers=3, layer_size=32, classes=10  -> input dim = 16*16*4 = 1024.
    model = FCNetPallas(input_size=16, channels=4, num_layers=3,
                        layer_size=32, classes=10, key=k_param)

    x = jax.random.normal(k_x, (2, 4, 16, 16), jnp.float32)   # NCHW

    out = jax.block_until_ready(model(x))
    assert out.shape == (2, 10)

    # Plain-JAX reference using the SAME mixed-precision recipe
    # (bf16 operands, f32 accumulation, f32 bias + relu on every layer).
    h = x.reshape(2, -1)
    for w, b in zip(model.weights, model.biases):
        acc = jnp.dot(h.astype(model.compute_dtype), w.astype(model.compute_dtype),
                      preferred_element_type=jnp.float32)
        h = jnp.maximum(acc + b, 0.0)
    assert jnp.allclose(out, h, atol=2e-2, rtol=2e-2), \
        float(jnp.max(jnp.abs(out - h)))

    print("KERNEL_OK")
</pallas_src>

<mosaic_0001>
module attributes {stable_mosaic.version = 11 : i64} {
  func.func @_fcnet_fused_kernel(%arg0: i32, %arg1: memref<16x1024xf32, #tpu.memory_space<vmem>>, %arg2: memref<1024x128xbf16, #tpu.memory_space<vmem>>, %arg3: memref<1x128xf32, #tpu.memory_space<vmem>>, %arg4: memref<3x128x128xbf16, #tpu.memory_space<vmem>>, %arg5: memref<3x1x128xf32, #tpu.memory_space<vmem>>, %arg6: memref<16x128xf32, #tpu.memory_space<vmem>>) attributes {dimension_semantics = [#tpu.dimension_semantics<parallel>], iteration_bounds = array<i64: 1>, scalar_prefetch = 0 : i64, scratch_operands = 0 : i64, tpu.core_type = #tpu.core_type<tc>, window_params = [{transform_indices = @transform_0, window_bounds = array<i64: 16, 1024>}, {pipeline_mode = #tpu.pipeline_mode<synchronous>, transform_indices = @transform_1, window_bounds = array<i64: 1024, 128>}, {pipeline_mode = #tpu.pipeline_mode<synchronous>, transform_indices = @transform_2, window_bounds = array<i64: 1, 128>}, {pipeline_mode = #tpu.pipeline_mode<synchronous>, transform_indices = @transform_3, window_bounds = array<i64: 3, 128, 128>}, {pipeline_mode = #tpu.pipeline_mode<synchronous>, transform_indices = @transform_4, window_bounds = array<i64: 3, 1, 128>}, {transform_indices = @transform_5, window_bounds = array<i64: 16, 128>}]} {
    %c0 = arith.constant 0 : index
    %c0_0 = arith.constant 0 : index
    %0 = vector.load %arg1[%c0, %c0_0] : memref<16x1024xf32, #tpu.memory_space<vmem>>, vector<16x1024xf32>
    %1 = arith.truncf %0 : vector<16x1024xf32> to vector<16x1024xbf16>
    %c0_1 = arith.constant 0 : index
    %c0_2 = arith.constant 0 : index
    %2 = vector.load %arg2[%c0_1, %c0_2] : memref<1024x128xbf16, #tpu.memory_space<vmem>>, vector<1024x128xbf16>
    %cst = arith.constant dense<0.000000e+00> : vector<16x128xf32>
    %3 = tpu.matmul %1, %2, %cst {dimension_numbers = #tpu.dot_dimension_numbers<[1], [0], [0], [1], [0, 0, 1, 1], [], []>} : vector<16x1024xbf16>, vector<1024x128xbf16>, vector<16x128xf32> -> vector<16x128xf32>
    %c0_3 = arith.constant 0 : index
    %c0_4 = arith.constant 0 : index
    %4 = vector.load %arg3[%c0_3, %c0_4] : memref<1x128xf32, #tpu.memory_space<vmem>>, vector<1x128xf32>
    %5 = vector.broadcast %4 : vector<1x128xf32> to vector<16x128xf32>
    %6 = arith.addf %3, %5 : vector<16x128xf32>
    %cst_5 = arith.constant 0.000000e+00 : f32
    %7 = vector.broadcast %cst_5 : f32 to vector<16x128xf32>
    %8 = arith.maximumf %6, %7 : vector<16x128xf32>
    %c0_6 = arith.constant 0 : index
    %c0_7 = arith.constant 0 : index
    %9 = vector.load %arg6[%c0_6, %c0_7] : memref<16x128xf32, #tpu.memory_space<vmem>>, vector<16x128xf32>
    tpu.vector_store %arg6[%c0_6, %c0_7], %8 {strides = array<i32>} : memref<16x128xf32, #tpu.memory_space<vmem>>, vector<16x128xf32>,
    %c0_8 = arith.constant 0 : index
    %c0_9 = arith.constant 0 : index
    %10 = vector.load %arg6[%c0_8, %c0_9] : memref<16x128xf32, #tpu.memory_space<vmem>>, vector<16x128xf32>
    %11 = arith.truncf %10 : vector<16x128xf32> to vector<16x128xbf16>
    %c0_10 = arith.constant 0 : index
    %c0_11 = arith.constant 0 : index
    %c0_12 = arith.constant 0 : index
    %12 = vector.load %arg4[%c0_10, %c0_11, %c0_12] : memref<3x128x128xbf16, #tpu.memory_space<vmem>>, vector<1x128x128xbf16>
    %13 = vector.shape_cast %12 : vector<1x128x128xbf16> to vector<128x128xbf16>
    %cst_13 = arith.constant dense<0.000000e+00> : vector<16x128xf32>
    %14 = tpu.matmul %11, %13, %cst_13 {dimension_numbers = #tpu.dot_dimension_numbers<[1], [0], [0], [1], [0, 0, 1, 1], [], []>} : vector<16x128xbf16>, vector<128x128xbf16>, vector<16x128xf32> -> vector<16x128xf32>
    %c0_14 = arith.constant 0 : index
    %c0_15 = arith.constant 0 : index
    %c0_16 = arith.constant 0 : index
    %15 = vector.load %arg5[%c0_14, %c0_15, %c0_16] : memref<3x1x128xf32, #tpu.memory_space<vmem>>, vector<1x1x128xf32>
    %16 = vector.shape_cast %15 : vector<1x1x128xf32> to vector<1x128xf32>
    %17 = vector.broadcast %16 : vector<1x128xf32> to vector<16x128xf32>
    %18 = arith.addf %14, %17 : vector<16x128xf32>
    %cst_17 = arith.constant 0.000000e+00 : f32
    %19 = vector.broadcast %cst_17 : f32 to vector<16x128xf32>
    %20 = arith.maximumf %18, %19 : vector<16x128xf32>
    %c0_18 = arith.constant 0 : index
    %c0_19 = arith.constant 0 : index
    %21 = vector.load %arg6[%c0_18, %c0_19] : memref<16x128xf32, #tpu.memory_space<vmem>>, vector<16x128xf32>
    tpu.vector_store %arg6[%c0_18, %c0_19], %20 {strides = array<i32>} : memref<16x128xf32, #tpu.memory_space<vmem>>, vector<16x128xf32>,
    %c0_20 = arith.constant 0 : index
    %c0_21 = arith.constant 0 : index
    %22 = vector.load %arg6[%c0_20, %c0_21] : memref<16x128xf32, #tpu.memory_space<vmem>>, vector<16x128xf32>
    %23 = arith.truncf %22 : vector<16x128xf32> to vector<16x128xbf16>
    %c1 = arith.constant 1 : index
    %c0_22 = arith.constant 0 : index
    %c0_23 = arith.constant 0 : index
    %24 = vector.load %arg4[%c1, %c0_22, %c0_23] : memref<3x128x128xbf16, #tpu.memory_space<vmem>>, vector<1x128x128xbf16>
    %25 = vector.shape_cast %24 : vector<1x128x128xbf16> to vector<128x128xbf16>
    %cst_24 = arith.constant dense<0.000000e+00> : vector<16x128xf32>
    %26 = tpu.matmul %23, %25, %cst_24 {dimension_numbers = #tpu.dot_dimension_numbers<[1], [0], [0], [1], [0, 0, 1, 1], [], []>} : vector<16x128xbf16>, vector<128x128xbf16>, vector<16x128xf32> -> vector<16x128xf32>
    %c1_25 = arith.constant 1 : index
    %c0_26 = arith.constant 0 : index
    %c0_27 = arith.constant 0 : index
    %27 = vector.load %arg5[%c1_25, %c0_26, %c0_27] : memref<3x1x128xf32, #tpu.memory_space<vmem>>, vector<1x1x128xf32>
    %28 = vector.shape_cast %27 : vector<1x1x128xf32> to vector<1x128xf32>
    %29 = vector.broadcast %28 : vector<1x128xf32> to vector<16x128xf32>
    %30 = arith.addf %26, %29 : vector<16x128xf32>
    %cst_28 = arith.constant 0.000000e+00 : f32
    %31 = vector.broadcast %cst_28 : f32 to vector<16x128xf32>
    %32 = arith.maximumf %30, %31 : vector<16x128xf32>
    %c0_29 = arith.constant 0 : index
    %c0_30 = arith.constant 0 : index
    %33 = vector.load %arg6[%c0_29, %c0_30] : memref<16x128xf32, #tpu.memory_space<vmem>>, vector<16x128xf32>
    tpu.vector_store %arg6[%c0_29, %c0_30], %32 {strides = array<i32>} : memref<16x128xf32, #tpu.memory_space<vmem>>, vector<16x128xf32>,
    %c0_31 = arith.constant 0 : index
    %c0_32 = arith.constant 0 : index
    %34 = vector.load %arg6[%c0_31, %c0_32] : memref<16x128xf32, #tpu.memory_space<vmem>>, vector<16x128xf32>
    %35 = arith.truncf %34 : vector<16x128xf32> to vector<16x128xbf16>
    %c2 = arith.constant 2 : index
    %c0_33 = arith.constant 0 : index
    %c0_34 = arith.constant 0 : index
    %36 = vector.load %arg4[%c2, %c0_33, %c0_34] : memref<3x128x128xbf16, #tpu.memory_space<vmem>>, vector<1x128x128xbf16>
    %37 = vector.shape_cast %36 : vector<1x128x128xbf16> to vector<128x128xbf16>
    %cst_35 = arith.constant dense<0.000000e+00> : vector<16x128xf32>
    %38 = tpu.matmul %35, %37, %cst_35 {dimension_numbers = #tpu.dot_dimension_numbers<[1], [0], [0], [1], [0, 0, 1, 1], [], []>} : vector<16x128xbf16>, vector<128x128xbf16>, vector<16x128xf32> -> vector<16x128xf32>
    %c2_36 = arith.constant 2 : index
    %c0_37 = arith.constant 0 : index
    %c0_38 = arith.constant 0 : index
    %39 = vector.load %arg5[%c2_36, %c0_37, %c0_38] : memref<3x1x128xf32, #tpu.memory_space<vmem>>, vector<1x1x128xf32>
    %40 = vector.shape_cast %39 : vector<1x1x128xf32> to vector<1x128xf32>
    %41 = vector.broadcast %40 : vector<1x128xf32> to vector<16x128xf32>
    %42 = arith.addf %38, %41 : vector<16x128xf32>
    %cst_39 = arith.constant 0.000000e+00 : f32
    %43 = vector.broadcast %cst_39 : f32 to vector<16x128xf32>
    %44 = arith.maximumf %42, %43 : vector<16x128xf32>
    %c0_40 = arith.constant 0 : index
    %c0_41 = arith.constant 0 : index
    %45 = vector.load %arg6[%c0_40, %c0_41] : memref<16x128xf32, #tpu.memory_space<vmem>>, vector<16x128xf32>
    tpu.vector_store %arg6[%c0_40, %c0_41], %44 {strides = array<i32>} : memref<16x128xf32, #tpu.memory_space<vmem>>, vector<16x128xf32>,
    return
  }
  func.func @transform_0(%arg0: i32) -> (i32, i32) {
    %c0_i32 = arith.constant 0 : i32
    %c0_i32_0 = arith.constant 0 : i32
    return %arg0, %c0_i32 : i32, i32
  }
  func.func @transform_1(%arg0: i32) -> (i32, i32) {
    %c0_i32 = arith.constant 0 : i32
    %c0_i32_0 = arith.constant 0 : i32
    %c0_i32_1 = arith.constant 0 : i32
    return %c0_i32, %c0_i32_0 : i32, i32
  }
  func.func @transform_2(%arg0: i32) -> (i32, i32) {
    %c0_i32 = arith.constant 0 : i32
    %c0_i32_0 = arith.constant 0 : i32
    %c0_i32_1 = arith.constant 0 : i32
    return %c0_i32, %c0_i32_0 : i32, i32
  }
  func.func @transform_3(%arg0: i32) -> (i32, i32, i32) {
    %c0_i32 = arith.constant 0 : i32
    %c0_i32_0 = arith.constant 0 : i32
    %c0_i32_1 = arith.constant 0 : i32
    %c0_i32_2 = arith.constant 0 : i32
    return %c0_i32, %c0_i32_0, %c0_i32_1 : i32, i32, i32
  }
  func.func @transform_4(%arg0: i32) -> (i32, i32, i32) {
    %c0_i32 = arith.constant 0 : i32
    %c0_i32_0 = arith.constant 0 : i32
    %c0_i32_1 = arith.constant 0 : i32
    %c0_i32_2 = arith.constant 0 : i32
    return %c0_i32, %c0_i32_0, %c0_i32_1 : i32, i32, i32
  }
  func.func @transform_5(%arg0: i32) -> (i32, i32) {
    %c0_i32 = arith.constant 0 : i32
    %c0_i32_0 = arith.constant 0 : i32
    return %arg0, %c0_i32 : i32, i32
  }
}

</mosaic_0001>

<llo_original>
// kernel: _fcnet_forward.1
$region0: #{_fcnet_forward.1}
  #allocation0 [shape = 'u32[]', space=smem, size = 0x4, offset = 0x4, fixed_abs, tag = 'smem constant byte address 0x4 - core index']
  #allocation1 [shape = 'u32[144,128]{1,0:T(1,128)}', space=vmem, size = 0x12000, scoped, tag = 'internal scratch']
  %s0 = inlined_call_operand.vmem [shape: f32[16,1024], index: 0, kind: input, shape index: {}]
  %s1 = inlined_call_operand.hbm [shape: bf16[1024,128], index: 1, kind: input, shape index: {}]
  %s2 = inlined_call_operand.vmem [shape: f32[1,128], index: 2, kind: input, shape index: {}]
  %s3 = inlined_call_operand.vmem [shape: bf16[3,128,128], index: 3, kind: input, shape index: {}]
  %s4 = inlined_call_operand.vmem [shape: f32[3,1,128], index: 4, kind: input, shape index: {}]
  %s5 = inlined_call_operand.vmem [shape: f32[16,128], index: 5, kind: output, shape index: {}]
  %s6 = sld [smem:[#allocation0]]
  $region34: #{_fcnet_forward.1} parent=0
    _
  %s8 = ssub.s32 1, %s6
  %s9 = scalar_select 0, %s8, %s6
  $region1: #{_fcnet_forward.1} parent=0
    #allocation2 [shape = 'u8[262144]{0}', space=vmem, size = 0x40000, scoped, tag = 'input window, operand 1, single buffered']
    #allocation3 [shape = 's32[1]{0}', space=sflag, size = 0x4, scoped, tag = 'scoped memory for _fcnet_forward.1']
    %10 = vsyncpa [#allocation3], 0
    // Predicated region
    $region2: #{_fcnet_forward.1} parent=1 // pred_check
      _
    $region3: #{_fcnet_forward.1} parent=1 // pred_check_branch
      %12 = sbr.rel (0) target = $region5
    $region4: #{_fcnet_forward.1} parent=1 // pred_region
      _
    $region5: #{_fcnet_forward.1} parent=1 // pred_fallthru
      _
    // Predicated region
    $region6: #{_fcnet_forward.1} parent=1 // pred_check
      _
    $region7: #{_fcnet_forward.1} parent=1 // pred_check_branch
      %14 = sbr.rel (0) target = $region9
    $region8: #{_fcnet_forward.1} parent=1 // pred_region
      %s16 = ssub.s32 8192, 8192
      %17 = vsyncadd [#allocation3], %s16
      %s18 = sshll.u32 [#allocation2], 4
      %s19 = int_to_ptr.vmem [resolvable:$true] %s18
      %24 = dma.hbm_to_vmem [thread:$0]  %s1, 8192, %s19, [#allocation3], 64, 64, 4
    $region9: #{_fcnet_forward.1} parent=1 // pred_fallthru
      _
    // Predicated region
    $region10: #{_fcnet_forward.1} parent=1 // pred_check
      _
    $region11: #{_fcnet_forward.1} parent=1 // pred_check_branch
      %26 = sbr.rel (0) target = $region13
    $region12: #{_fcnet_forward.1} parent=1 // pred_region
      _
    $region13: #{_fcnet_forward.1} parent=1 // pred_fallthru
      _
    // Predicated region
    $region14: #{_fcnet_forward.1} parent=1 // pred_check
      _
    $region15: #{_fcnet_forward.1} parent=1 // pred_check_branch
      %28 = sbr.rel (0) target = $region17
    $region16: #{_fcnet_forward.1} parent=1 // pred_region
      _
    $region17: #{_fcnet_forward.1} parent=1 // pred_fallthru
      _
    // Predicated region
    $region18: #{_fcnet_forward.1} parent=1 // pred_check
      _
    $region19: #{_fcnet_forward.1} parent=1 // pred_check_branch
      %30 = sbr.rel (0) target = $region21
    $region20: #{_fcnet_forward.1} parent=1 // pred_region
      _
    $region21: #{_fcnet_forward.1} parent=1 // pred_fallthru
      _
    // Predicated region
    $region22: #{_fcnet_forward.1} parent=1 // pred_check
      _
    $region23: #{_fcnet_forward.1} parent=1 // pred_check_branch
      %32 = sbr.rel (0) target = $region25
    $region24: #{_fcnet_forward.1} parent=1 // pred_region
      %33 = dma.done [#allocation3], 8192
    $region25: #{_fcnet_forward.1} parent=1 // pred_fallthru
      _
    %v35 = vld [vmem:[%s0] sm:$0xff]
    %v36 = vld [vmem:[%s0 + $0x8] sm:$0xff]
    %v37 = vld [vmem:[%s0 + $0x10] sm:$0xff]
    %v38 = vld [vmem:[%s0 + $0x18] sm:$0xff]
    %v39 = vld [vmem:[%s0 + $0x20] sm:$0xff]
    %v40 = vld [vmem:[%s0 + $0x28] sm:$0xff]
    %v41 = vld [vmem:[%s0 + $0x30] sm:$0xff]
    %v42 = vld [vmem:[%s0 + $0x38] sm:$0xff]
    %v43 = vld [vmem:[%s0 + $0x40] sm:$0xff]
    %v44 = vld [vmem:[%s0 + $0x48] sm:$0xff]
    %v45 = vld [vmem:[%s0 + $0x50] sm:$0xff]
    %v46 = vld [vmem:[%s0 + $0x58] sm:$0xff]
    %v47 = vld [vmem:[%s0 + $0x60] sm:$0xff]
    %v48 = vld [vmem:[%s0 + $0x68] sm:$0xff]
    %v49 = vld [vmem:[%s0 + $0x70] sm:$0xff]
    %v50 = vld [vmem:[%s0 + $0x78] sm:$0xff]
    %v51 = vpack.c.bf16 %v43, %v35
    %v52 = vpack.c.bf16 %v44, %v36
    %v53 = vpack.c.bf16 %v45, %v37
    %v54 = vpack.c.bf16 %v46, %v38
    %v55 = vpack.c.bf16 %v47, %v39
    %v56 = vpack.c.bf16 %v48, %v40
    %v57 = vpack.c.bf16 %v49, %v41
    %v58 = vpack.c.bf16 %v50, %v42
    %v59 = vld [vmem:[#allocation2] sm:$0xf]
    %v60 = vld [vmem:[#allocation2 + $0x4] sm:$0xf]
    %v61 = vld [vmem:[#allocation2 + $0x8] sm:$0xf]
    %v62 = vld [vmem:[#allocation2 + $0xc] sm:$0xf]
    %v63 = vld [vmem:[#allocation2 + $0x10] sm:$0xf]
    %v64 = vld [vmem:[#allocation2 + $0x14] sm:$0xf]
    %v65 = vld [vmem:[#allocation2 + $0x18] sm:$0xf]
    %v66 = vld [vmem:[#allocation2 + $0x1c] sm:$0xf]
    %v67 = vld [vmem:[#allocation2 + $0x20] sm:$0xf]
    %v68 = vld [vmem:[#allocation2 + $0x24] sm:$0xf]
    %v69 = vld [vmem:[#allocation2 + $0x28] sm:$0xf]
    %v70 = vld [vmem:[#allocation2 + $0x2c] sm:$0xf]
    %v71 = vld [vmem:[#allocation2 + $0x30] sm:$0xf]
    %v72 = vld [vmem:[#allocation2 + $0x34] sm:$0xf]
    %v73 = vld [vmem:[#allocation2 + $0x38] sm:$0xf]
    %v74 = vld [vmem:[#allocation2 + $0x3c] sm:$0xf]
    %v75 = vld [vmem:[#allocation2 + $0x40] sm:$0xf]
    %v76 = vld [vmem:[#allocation2 + $0x44] sm:$0xf]
    %v77 = vld [vmem:[#allocation2 + $0x48] sm:$0xf]
    %v78 = vld [vmem:[#allocation2 + $0x4c] sm:$0xf]
    %v79 = vld [vmem:[#allocation2 + $0x50] sm:$0xf]
    %v80 = vld [vmem:[#allocation2 + $0x54] sm:$0xf]
    %v81 = vld [vmem:[#allocation2 + $0x58] sm:$0xf]
    %v82 = vld [vmem:[#allocation2 + $0x5c] sm:$0xf]
    %v83 = vld [vmem:[#allocation2 + $0x60] sm:$0xf]
    %v84 = vld [vmem:[#allocation2 + $0x64] sm:$0xf]
    %v85 = vld [vmem:[#allocation2 + $0x68] sm:$0xf]
    %v86 = vld [vmem:[#allocation2 + $0x6c] sm:$0xf]
    %v87 = vld [vmem:[#allocation2 + $0x70] sm:$0xf]
    %v88 = vld [vmem:[#allocation2 + $0x74] sm:$0xf]
    %v89 = vld [vmem:[#allocation2 + $0x78] sm:$0xf]
    %v90 = vld [vmem:[#allocation2 + $0x7c] sm:$0xf]
    %v91 = vld [vmem:[#allocation2 + $0x80] sm:$0xf]
    %v92 = vld [vmem:[#allocation2 + $0x84] sm:$0xf]
    %v93 = vld [vmem:[#allocation2 + $0x88] sm:$0xf]
    %v94 = vld [vmem:[#allocation2 + $0x8c] sm:$0xf]
    %v95 = vld [vmem:[#allocation2 + $0x90] sm:$0xf]
    %v96 = vld [vmem:[#allocation2 + $0x94] sm:$0xf]
    %v97 = vld [vmem:[#allocation2 + $0x98] sm:$0xf]
    %v98 = vld [vmem:[#allocation2 + $0x9c] sm:$0xf]
    %v99 = vld [vmem:[#allocation2 + $0xa0] sm:$0xf]
    %v100 = vld [vmem:[#allocation2 + $0xa4] sm:$0xf]
    %v101 = vld [vmem:[#allocation2 + $0xa8] sm:$0xf]
    %v102 = vld [vmem:[#allocation2 + $0xac] sm:$0xf]
    %v103 = vld [vmem:[#allocation2 + $0xb0] sm:$0xf]
    %v104 = vld [vmem:[#allocation2 + $0xb4] sm:$0xf]
    %v105 = vld [vmem:[#allocation2 + $0xb8] sm:$0xf]
    %v106 = vld [vmem:[#allocation2 + $0xbc] sm:$0xf]
    %v107 = vld [vmem:[#allocation2 + $0xc0] sm:$0xf]
    %v108 = vld [vmem:[#allocation2 + $0xc4] sm:$0xf]
    %v109 = vld [vmem:[#allocation2 + $0xc8] sm:$0xf]
    %v110 = vld [vmem:[#allocation2 + $0xcc] sm:$0xf]
    %v111 = vld [vmem:[#allocation2 + $0xd0] sm:$0xf]
    %v112 = vld [vmem:[#allocation2 + $0xd4] sm:$0xf]
    %v113 = vld [vmem:[#allocation2 + $0xd8] sm:$0xf]
    %v114 = vld [vmem:[#allocation2 + $0xdc] sm:$0xf]
    %v115 = vld [vmem:[#allocation2 + $0xe0] sm:$0xf]
    %v116 = vld [vmem:[#allocation2 + $0xe4] sm:$0xf]
    %v117 = vld [vmem:[#allocation2 + $0xe8] sm:$0xf]
    %v118 = vld [vmem:[#allocation2 + $0xec] sm:$0xf]
    %v119 = vld [vmem:[#allocation2 + $0xf0] sm:$0xf]
    %v120 = vld [vmem:[#allocation2 + $0xf4] sm:$0xf]
    %v121 = vld [vmem:[#allocation2 + $0xf8] sm:$0xf]
    %v122 = vld [vmem:[#allocation2 + $0xfc] sm:$0xf]
    %v123 = vld [vmem:[#allocation2 + $0x100] sm:$0xf]
    %v124 = vld [vmem:[#allocation2 + $0x104] sm:$0xf]
    %v125 = vld [vmem:[#allocation2 + $0x108] sm:$0xf]
    %v126 = vld [vmem:[#allocation2 + $0x10c] sm:$0xf]
    %v127 = vld [vmem:[#allocation2 + $0x110] sm:$0xf]
    %v128 = vld [vmem:[#allocation2 + $0x114] sm:$0xf]
    %v129 = vld [vmem:[#allocation2 + $0x118] sm:$0xf]
    %v130 = vld [vmem:[#allocation2 + $0x11c] sm:$0xf]
    %v131 = vld [vmem:[#allocation2 + $0x120] sm:$0xf]
    %v132 = vld [vmem:[#allocation2 + $0x124] sm:$0xf]
    %v133 = vld [vmem:[#allocation2 + $0x128] sm:$0xf]
    %v134 = vld [vmem:[#allocation2 + $0x12c] sm:$0xf]
    %v135 = vld [vmem:[#allocation2 + $0x130] sm:$0xf]
    %v136 = vld [vmem:[#allocation2 + $0x134] sm:$0xf]
    %v137 = vld [vmem:[#allocation2 + $0x138] sm:$0xf]
    %v138 = vld [vmem:[#allocation2 + $0x13c] sm:$0xf]
    %v139 = vld [vmem:[#allocation2 + $0x140] sm:$0xf]
    %v140 = vld [vmem:[#allocation2 + $0x144] sm:$0xf]
    %v141 = vld [vmem:[#allocation2 + $0x148] sm:$0xf]
    %v142 = vld [vmem:[#allocation2 + $0x14c] sm:$0xf]
    %v143 = vld [vmem:[#allocation2 + $0x150] sm:$0xf]
    %v144 = vld [vmem:[#allocation2 + $0x154] sm:$0xf]
    %v145 = vld [vmem:[#allocation2 + $0x158] sm:$0xf]
    %v146 = vld [vmem:[#allocation2 + $0x15c] sm:$0xf]
    %v147 = vld [vmem:[#allocation2 + $0x160] sm:$0xf]
    %v148 = vld [vmem:[#allocation2 + $0x164] sm:$0xf]
    %v149 = vld [vmem:[#allocation2 + $0x168] sm:$0xf]
    %v150 = vld [vmem:[#allocation2 + $0x16c] sm:$0xf]
    %v151 = vld [vmem:[#allocation2 + $0x170] sm:$0xf]
    %v152 = vld [vmem:[#allocation2 + $0x174] sm:$0xf]
    %v153 = vld [vmem:[#allocation2 + $0x178] sm:$0xf]
    %v154 = vld [vmem:[#allocation2 + $0x17c] sm:$0xf]
    %v155 = vld [vmem:[#allocation2 + $0x180] sm:$0xf]
    %v156 = vld [vmem:[#allocation2 + $0x184] sm:$0xf]
    %v157 = vld [vmem:[#allocation2 + $0x188] sm:$0xf]
    %v158 = vld [vmem:[#allocation2 + $0x18c] sm:$0xf]
    %v159 = vld [vmem:[#allocation2 + $0x190] sm:$0xf]
    %v160 = vld [vmem:[#allocation2 + $0x194] sm:$0xf]
    %v161 = vld [vmem:[#allocation2 + $0x198] sm:$0xf]
    %v162 = vld [vmem:[#allocation2 + $0x19c] sm:$0xf]
    %v163 = vld [vmem:[#allocation2 + $0x1a0] sm:$0xf]
    %v164 = vld [vmem:[#allocation2 + $0x1a4] sm:$0xf]
    %v165 = vld [vmem:[#allocation2 + $0x1a8] sm:$0xf]
    %v166 = vld [vmem:[#allocation2 + $0x1ac] sm:$0xf]
    %v167 = vld [vmem:[#allocation2 + $0x1b0] sm:$0xf]
    %v168 = vld [vmem:[#allocation2 + $0x1b4] sm:$0xf]
    %v169 = vld [vmem:[#allocation2 + $0x1b8] sm:$0xf]
    %v170 = vld [vmem:[#allocation2 + $0x1bc] sm:$0xf]
    %v171 = vld [vmem:[#allocation2 + $0x1c0] sm:$0xf]
    %v172 = vld [vmem:[#allocation2 + $0x1c4] sm:$0xf]
    %v173 = vld [vmem:[#allocation2 + $0x1c8] sm:$0xf]
    %v174 = vld [vmem:[#allocation2 + $0x1cc] sm:$0xf]
    %v175 = vld [vmem:[#allocation2 + $0x1d0] sm:$0xf]
    %v176 = vld [vmem:[#allocation2 + $0x1d4] sm:$0xf]
    %v177 = vld [vmem:[#allocation2 + $0x1d8] sm:$0xf]
    %v178 = vld [vmem:[#allocation2 + $0x1dc] sm:$0xf]
    %v179 = vld [vmem:[#allocation2 + $0x1e0] sm:$0xf]
    %v180 = vld [vmem:[#allocation2 + $0x1e4] sm:$0xf]
    %v181 = vld [vmem:[#allocation2 + $0x1e8] sm:$0xf]
    %v182 = vld [vmem:[#allocation2 + $0x1ec] sm:$0xf]
    %v183 = vld [vmem:[#allocation2 + $0x1f0] sm:$0xf]
    %v184 = vld [vmem:[#allocation2 + $0x1f4] sm:$0xf]
    %v185 = vld [vmem:[#allocation2 + $0x1f8] sm:$0xf]
    %v186 = vld [vmem:[#allocation2 + $0x1fc] sm:$0xf]
    %v187 = vld [vmem:[%s2] sm:$0x1]
    %v189 = vlaneseq
    %v190 = vshrl.u32 %v189, 7
    %v191 = vsub.s32 0, %v190
    %v192 = vrot.slane %v187, %v191
    %v322 = vunpack.c.l.b16 %v59
    %v323 = vunpack.c.l.b16 %v60
    %v324 = vunpack.c.l.b16 %v61
    %v325 = vunpack.c.l.b16 %v62
    %v326 = vunpack.c.l.b16 %v63
    %v327 = vunpack.c.l.b16 %v64
    %v328 = vunpack.c.l.b16 %v65
    %v329 = vunpack.c.l.b16 %v66
    %v330 = vunpack.c.l.b16 %v67
    %v331 = vunpack.c.l.b16 %v68
    %v332 = vunpack.c.l.b16 %v69
    %v333 = vunpack.c.l.b16 %v70
    %v334 = vunpack.c.l.b16 %v71
    %v335 = vunpack.c.l.b16 %v72
    %v336 = vunpack.c.l.b16 %v73
    %v337 = vunpack.c.l.b16 %v74
    %v338 = vunpack.c.l.b16 %v75
    %v339 = vunpack.c.l.b16 %v76
    %v340 = vunpack.c.l.b16 %v77
    %v341 = vunpack.c.l.b16 %v78
    %v342 = vunpack.c.l.b16 %v79
    %v343 = vunpack.c.l.b16 %v80
    %v344 = vunpack.c.l.b16 %v81
    %v345 = vunpack.c.l.b16 %v82
    %v346 = vunpack.c.l.b16 %v83
    %v347 = vunpack.c.l.b16 %v84
    %v348 = vunpack.c.l.b16 %v85
    %v349 = vunpack.c.l.b16 %v86
    %v350 = vunpack.c.l.b16 %v87
    %v351 = vunpack.c.l.b16 %v88
    %v352 = vunpack.c.l.b16 %v89
    %v353 = vunpack.c.l.b16 %v90
    %v354 = vunpack.c.l.b16 %v91
    %v355 = vunpack.c.l.b16 %v92
    %v356 = vunpack.c.l.b16 %v93
    %v357 = vunpack.c.l.b16 %v94
    %v358 = vunpack.c.l.b16 %v95
    %v359 = vunpack.c.l.b16 %v96
    %v360 = vunpack.c.l.b16 %v97
    %v361 = vunpack.c.l.b16 %v98
    %v362 = vunpack.c.l.b16 %v99
    %v363 = vunpack.c.l.b16 %v100
    %v364 = vunpack.c.l.b16 %v101
    %v365 = vunpack.c.l.b16 %v102
    %v366 = vunpack.c.l.b16 %v103
    %v367 = vunpack.c.l.b16 %v104
    %v368 = vunpack.c.l.b16 %v105
    %v369 = vunpack.c.l.b16 %v106
    %v370 = vunpack.c.l.b16 %v107
    %v371 = vunpack.c.l.b16 %v108
    %v372 = vunpack.c.l.b16 %v109
    %v373 = vunpack.c.l.b16 %v110
    %v374 = vunpack.c.l.b16 %v111
    %v375 = vunpack.c.l.b16 %v112
    %v376 = vunpack.c.l.b16 %v113
    %v377 = vunpack.c.l.b16 %v114
    %v378 = vunpack.c.l.b16 %v115
    %v379 = vunpack.c.l.b16 %v116
    %v380 = vunpack.c.l.b16 %v117
    %v381 = vunpack.c.l.b16 %v118
    %v382 = vunpack.c.l.b16 %v119
    %v383 = vunpack.c.l.b16 %v120
    %v384 = vunpack.c.l.b16 %v121
    %v385 = vunpack.c.l.b16 %v122
    %v386 = vunpack.c.l.b16 %v123
    %v387 = vunpack.c.l.b16 %v124
    %v388 = vunpack.c.l.b16 %v125
    %v389 = vunpack.c.l.b16 %v126
    %v390 = vunpack.c.l.b16 %v127
    %v391 = vunpack.c.l.b16 %v128
    %v392 = vunpack.c.l.b16 %v129
    %v393 = vunpack.c.l.b16 %v130
    %v394 = vunpack.c.l.b16 %v131
    %v395 = vunpack.c.l.b16 %v132
    %v396 = vunpack.c.l.b16 %v133
    %v397 = vunpack.c.l.b16 %v134
    %v398 = vunpack.c.l.b16 %v135
    %v399 = vunpack.c.l.b16 %v136
    %v400 = vunpack.c.l.b16 %v137
    %v401 = vunpack.c.l.b16 %v138
    %v402 = vunpack.c.l.b16 %v139
    %v403 = vunpack.c.l.b16 %v140
    %v404 = vunpack.c.l.b16 %v141
    %v405 = vunpack.c.l.b16 %v142
    %v406 = vunpack.c.l.b16 %v143
    %v407 = vunpack.c.l.b16 %v144
    %v408 = vunpack.c.l.b16 %v145
    %v409 = vunpack.c.l.b16 %v146
    %v410 = vunpack.c.l.b16 %v147
    %v411 = vunpack.c.l.b16 %v148
    %v412 = vunpack.c.l.b16 %v149
    %v413 = vunpack.c.l.b16 %v150
    %v414 = vunpack.c.l.b16 %v151
    %v415 = vunpack.c.l.b16 %v152
    %v416 = vunpack.c.l.b16 %v153
    %v417 = vunpack.c.l.b16 %v154
    %v418 = vunpack.c.l.b16 %v155
    %v419 = vunpack.c.l.b16 %v156
    %v420 = vunpack.c.l.b16 %v157
    %v421 = vunpack.c.l.b16 %v158
    %v422 = vunpack.c.l.b16 %v159
    %v423 = vunpack.c.l.b16 %v160
    %v424 = vunpack.c.l.b16 %v161
    %v425 = vunpack.c.l.b16 %v162
    %v426 = vunpack.c.l.b16 %v163
    %v427 = vunpack.c.l.b16 %v164
    %v428 = vunpack.c.l.b16 %v165
    %v429 = vunpack.c.l.b16 %v166
    %v430 = vunpack.c.l.b16 %v167
    %v431 = vunpack.c.l.b16 %v168
    %v432 = vunpack.c.l.b16 %v169
    %v433 = vunpack.c.l.b16 %v170
    %v434 = vunpack.c.l.b16 %v171
    %v435 = vunpack.c.l.b16 %v172
    %v436 = vunpack.c.l.b16 %v173
    %v437 = vunpack.c.l.b16 %v174
    %v438 = vunpack.c.l.b16 %v175
    %v439 = vunpack.c.l.b16 %v176
    %v440 = vunpack.c.l.b16 %v177
    %v441 = vunpack.c.l.b16 %v178
    %v442 = vunpack.c.l.b16 %v179
    %v443 = vunpack.c.l.b16 %v180
    %v444 = vunpack.c.l.b16 %v181
    %v445 = vunpack.c.l.b16 %v182
    %v446 = vunpack.c.l.b16 %v183
    %v447 = vunpack.c.l.b16 %v184
    %v448 = vunpack.c.l.b16 %v185
    %v449 = vunpack.c.l.b16 %v186
    %v450 = vpack.c.b16 %v323, %v322
    %v451 = vpack.c.b16 %v325, %v324
    %v452 = vpack.c.b16 %v327, %v326
    %v453 = vpack.c.b16 %v329, %v328
    %v454 = vpack.c.b16 %v331, %v330
    %v455 = vpack.c.b16 %v333, %v332
    %v456 = vpack.c.b16 %v335, %v334
    %v457 = vpack.c.b16 %v337, %v336
    %v458 = vpack.c.b16 %v339, %v338
    %v459 = vpack.c.b16 %v341, %v340
    %v460 = vpack.c.b16 %v343, %v342
    %v461 = vpack.c.b16 %v345, %v344
    %v462 = vpack.c.b16 %v347, %v346
    %v463 = vpack.c.b16 %v349, %v348
    %v464 = vpack.c.b16 %v351, %v350
    %v465 = vpack.c.b16 %v353, %v352
    %v466 = vpack.c.b16 %v355, %v354
    %v467 = vpack.c.b16 %v357, %v356
    %v468 = vpack.c.b16 %v359, %v358
    %v469 = vpack.c.b16 %v361, %v360
    %v470 = vpack.c.b16 %v363, %v362
    %v471 = vpack.c.b16 %v365, %v364
    %v472 = vpack.c.b16 %v367, %v366
    %v473 = vpack.c.b16 %v369, %v368
    %v474 = vpack.c.b16 %v371, %v370
    %v475 = vpack.c.b16 %v373, %v372
    %v476 = vpack.c.b16 %v375, %v374
    %v477 = vpack.c.b16 %v377, %v376
    %v478 = vpack.c.b16 %v379, %v378
    %v479 = vpack.c.b16 %v381, %v380
    %v480 = vpack.c.b16 %v383, %v382
    %v481 = vpack.c.b16 %v385, %v384
    %v482 = vpack.c.b16 %v387, %v386
    %v483 = vpack.c.b16 %v389, %v388
    %v484 = vpack.c.b16 %v391, %v390
    %v485 = vpack.c.b16 %v393, %v392
    %v486 = vpack.c.b16 %v395, %v394
    %v487 = vpack.c.b16 %v397, %v396
    %v488 = vpack.c.b16 %v399, %v398
    %v489 = vpack.c.b16 %v401, %v400
    %v490 = vpack.c.b16 %v403, %v402
    %v491 = vpack.c.b16 %v405, %v404
    %v492 = vpack.c.b16 %v407, %v406
    %v493 = vpack.c.b16 %v409, %v408
    %v494 = vpack.c.b16 %v411, %v410
    %v495 = vpack.c.b16 %v413, %v412
    %v496 = vpack.c.b16 %v415, %v414
    %v497 = vpack.c.b16 %v417, %v416
    %v498 = vpack.c.b16 %v419, %v418
    %v499 = vpack.c.b16 %v421, %v420
    %v500 = vpack.c.b16 %v423, %v422
    %v501 = vpack.c.b16 %v425, %v424
    %v502 = vpack.c.b16 %v427, %v426
    %v503 = vpack.c.b16 %v429, %v428
    %v504 = vpack.c.b16 %v431, %v430
    %v505 = vpack.c.b16 %v433, %v432
    %v506 = vpack.c.b16 %v435, %v434
    %v507 = vpack.c.b16 %v437, %v436
    %v508 = vpack.c.b16 %v439, %v438
    %v509 = vpack.c.b16 %v441, %v440
    %v510 = vpack.c.b16 %v443, %v442
    %v511 = vpack.c.b16 %v445, %v444
    %v512 = vpack.c.b16 %v447, %v446
    %v513 = vpack.c.b16 %v449, %v448
    %578 = vmatprep.subr.bf16.mxu0 0
    %579 = vmatpush1.bf16.msra.mxu0 %v450
    %580 = vmatprep.subr.bf16.mxu0 0
    %581 = vmatpush1.bf16.msra.mxu0 %v451
    %582 = vmatprep.subr.bf16.mxu0 0
    %583 = vmatpush1.bf16.msra.mxu0 %v452
    %584 = vmatprep.subr.bf16.mxu0 0
    %585 = vmatpush1.bf16.msra.mxu0 %v453
    %586 = vmatprep.subr.bf16.mxu0 0
    %587 = vmatpush1.bf16.msra.mxu0 %v454
    %588 = vmatprep.subr.bf16.mxu0 0
    %589 = vmatpush1.bf16.msra.mxu0 %v455
    %590 = vmatprep.subr.bf16.mxu0 0
    %591 = vmatpush1.bf16.msra.mxu0 %v456
    %592 = vmatprep.subr.bf16.mxu0 0
    %593 = vmatpush1.bf16.msra.mxu0 %v457
    %594 = vmatprep.subr.bf16.mxu0 0
    %595 = vmatpush1.bf16.msra.mxu0 %v458
    %596 = vmatprep.subr.bf16.mxu0 0
    %597 = vmatpush1.bf16.msra.mxu0 %v459
    %598 = vmatprep.subr.bf16.mxu0 0
    %599 = vmatpush1.bf16.msra.mxu0 %v460
    %600 = vmatprep.subr.bf16.mxu0 0
    %601 = vmatpush1.bf16.msra.mxu0 %v461
    %602 = vmatprep.subr.bf16.mxu0 0
    %603 = vmatpush1.bf16.msra.mxu0 %v462
    %604 = vmatprep.subr.bf16.mxu0 0
    %605 = vmatpush1.bf16.msra.mxu0 %v463
    %606 = vmatprep.subr.bf16.mxu0 0
    %607 = vmatpush1.bf16.msra.mxu0 %v464
    %608 = vmatprep.subr.bf16.mxu0 0
    %609 = vmatpush1.bf16.msra.mxu0 %v465
    %610 = vmatprep.mubr.bf16.mxu0 %v52
    %611 = vmatmul.mubr.bf16.gmra.mrb[0].mxu0 %v51
    %v612 = vpop.f32.mrb[0].mxu0
    %v613 = vadd.f32 %v192, %v612
    %v614 = vpop.f32.mrb[0].mxu0
    %v615 = vpop.f32.mrb[0].mxu0
    %v616 = vadd.f32 %v192, %v615
    %v617 = vpop.f32.mrb[0].mxu0
    %618 = vdwg.mxu0
    %619 = vmatprep.subr.bf16.mxu0 0
    %620 = vmatpush1.bf16.msra.mxu0 %v466
    %621 = vmatprep.subr.bf16.mxu0 0
    %622 = vmatpush1.bf16.msra.mxu0 %v467
    %623 = vmatprep.subr.bf16.mxu0 0
    %624 = vmatpush1.bf16.msra.mxu0 %v468
    %625 = vmatprep.subr.bf16.mxu0 0
    %626 = vmatpush1.bf16.msra.mxu0 %v469
    %627 = vmatprep.subr.bf16.mxu0 0
    %628 = vmatpush1.bf16.msra.mxu0 %v470
    %629 = vmatprep.subr.bf16.mxu0 0
    %630 = vmatpush1.bf16.msra.mxu0 %v471
    %631 = vmatprep.subr.bf16.mxu0 0
    %632 = vmatpush1.bf16.msra.mxu0 %v472
    %633 = vmatprep.subr.bf16.mxu0 0
    %634 = vmatpush1.bf16.msra.mxu0 %v473
    %635 = vmatprep.subr.bf16.mxu0 0
    %636 = vmatpush1.bf16.msra.mxu0 %v474
    %637 = vmatprep.subr.bf16.mxu0 0
    %638 = vmatpush1.bf16.msra.mxu0 %v475
    %639 = vmatprep.subr.bf16.mxu0 0
    %640 = vmatpush1.bf16.msra.mxu0 %v476
    %641 = vmatprep.subr.bf16.mxu0 0
    %642 = vmatpush1.bf16.msra.mxu0 %v477
    %643 = vmatprep.subr.bf16.mxu0 0
    %644 = vmatpush1.bf16.msra.mxu0 %v478
    %645 = vmatprep.subr.bf16.mxu0 0
    %646 = vmatpush1.bf16.msra.mxu0 %v479
    %647 = vmatprep.subr.bf16.mxu0 0
    %648 = vmatpush1.bf16.msra.mxu0 %v480
    %649 = vmatprep.subr.bf16.mxu0 0
    %650 = vmatpush1.bf16.msra.mxu0 %v481
    %651 = vmatprep.mubr.bf16.mxu0 %v54
    %652 = vmatmul.mubr.bf16.gmra.mrb[0].mxu0 %v53
    %v653 = vpop.f32.mrb[0].mxu0
    %v654 = vadd.f32 %v613, %v653
    %v655 = vpop.f32.mrb[0].mxu0
    %v656 = vpop.f32.mrb[0].mxu0
    %v657 = vadd.f32 %v616, %v656
    %v658 = vpop.f32.mrb[0].mxu0
    %659 = vdwg.mxu0
    %660 = vmatprep.subr.bf16.mxu0 0
    %661 = vmatpush1.bf16.msra.mxu0 %v482
    %662 = vmatprep.subr.bf16.mxu0 0
    %663 = vmatpush1.bf16.msra.mxu0 %v483
    %664 = vmatprep.subr.bf16.mxu0 0
    %665 = vmatpush1.bf16.msra.mxu0 %v484
    %666 = vmatprep.subr.bf16.mxu0 0
    %667 = vmatpush1.bf16.msra.mxu0 %v485
    %668 = vmatprep.subr.bf16.mxu0 0
    %669 = vmatpush1.bf16.msra.mxu0 %v486
    %670 = vmatprep.subr.bf16.mxu0 0
    %671 = vmatpush1.bf16.msra.mxu0 %v487
    %672 = vmatprep.subr.bf16.mxu0 0
    %673 = vmatpush1.bf16.msra.mxu0 %v488
    %674 = vmatprep.subr.bf16.mxu0 0
    %675 = vmatpush1.bf16.msra.mxu0 %v489
    %676 = vmatprep.subr.bf16.mxu0 0
    %677 = vmatpush1.bf16.msra.mxu0 %v490
    %678 = vmatprep.subr.bf16.mxu0 0
    %679 = vmatpush1.bf16.msra.mxu0 %v491
    %680 = vmatprep.subr.bf16.mxu0 0
    %681 = vmatpush1.bf16.msra.mxu0 %v492
    %682 = vmatprep.subr.bf16.mxu0 0
    %683 = vmatpush1.bf16.msra.mxu0 %v493
    %684 = vmatprep.subr.bf16.mxu0 0
    %685 = vmatpush1.bf16.msra.mxu0 %v494
    %686 = vmatprep.subr.bf16.mxu0 0
    %687 = vmatpush1.bf16.msra.mxu0 %v495
    %688 = vmatprep.subr.bf16.mxu0 0
    %689 = vmatpush1.bf16.msra.mxu0 %v496
    %690 = vmatprep.subr.bf16.mxu0 0
    %691 = vmatpush1.bf16.msra.mxu0 %v497
    %692 = vmatprep.mubr.bf16.mxu0 %v56
    %693 = vmatmul.mubr.bf16.gmra.mrb[0].mxu0 %v55
    %v694 = vpop.f32.mrb[0].mxu0
    %v695 = vadd.f32 %v654, %v694
    %v696 = vpop.f32.mrb[0].mxu0
    %v697 = vpop.f32.mrb[0].mxu0
    %v698 = vadd.f32 %v657, %v697
    %v699 = vpop.f32.mrb[0].mxu0
    %700 = vdwg.mxu0
    %701 = vmatprep.subr.bf16.mxu0 0
    %702 = vmatpush1.bf16.msra.mxu0 %v498
    %703 = vmatprep.subr.bf16.mxu0 0
    %704 = vmatpush1.bf16.msra.mxu0 %v499
    %705 = vmatprep.subr.bf16.mxu0 0
    %706 = vmatpush1.bf16.msra.mxu0 %v500
    %707 = vmatprep.subr.bf16.mxu0 0
    %708 = vmatpush1.bf16.msra.mxu0 %v501
    %709 = vmatprep.subr.bf16.mxu0 0
    %710 = vmatpush1.bf16.msra.mxu0 %v502
    %711 = vmatprep.subr.bf16.mxu0 0
    %712 = vmatpush1.bf16.msra.mxu0 %v503
    %713 = vmatprep.subr.bf16.mxu0 0
    %714 = vmatpush1.bf16.msra.mxu0 %v504
    %715 = vmatprep.subr.bf16.mxu0 0
    %716 = vmatpush1.bf16.msra.mxu0 %v505
    %717 = vmatprep.subr.bf16.mxu0 0
    %718 = vmatpush1.bf16.msra.mxu0 %v506
    %719 = vmatprep.subr.bf16.mxu0 0
    %720 = vmatpush1.bf16.msra.mxu0 %v507
    %721 = vmatprep.subr.bf16.mxu0 0
    %722 = vmatpush1.bf16.msra.mxu0 %v508
    %723 = vmatprep.subr.bf16.mxu0 0
    %724 = vmatpush1.bf16.msra.mxu0 %v509
    %725 = vmatprep.subr.bf16.mxu0 0
    %726 = vmatpush1.bf16.msra.mxu0 %v510
    %727 = vmatprep.subr.bf16.mxu0 0
    %728 = vmatpush1.bf16.msra.mxu0 %v511
    %729 = vmatprep.subr.bf16.mxu0 0
    %730 = vmatpush1.bf16.msra.mxu0 %v512
    %731 = vmatprep.subr.bf16.mxu0 0
    %732 = vmatpush1.bf16.msra.mxu0 %v513
    %733 = vmatprep.mubr.bf16.mxu0 %v58
    %734 = vmatmul.mubr.bf16.gmra.mrb[0].mxu0 %v57
    %v735 = vpop.f32.mrb[0].mxu0
    %v736 = vadd.f32 %v695, %v735
    %v737 = vpop.f32.mrb[0].mxu0
    %v738 = vpop.f32.mrb[0].mxu0
    %v739 = vadd.f32 %v698, %v738
    %v740 = vpop.f32.mrb[0].mxu0
    %741 = vdwg.mxu0
    %v742 = vmax.f32 %v736, 0.0
    %v743 = vmax.f32 %v739, 0.0
    %744 = vst [vmem:[%s5] sm:$0xff] %v742
    %745 = vst [vmem:[%s5 + $0x8] sm:$0xff] %v743
    %v746 = vld [vmem:[%s5] sm:$0xff]
    %v747 = vld [vmem:[%s5 + $0x8] sm:$0xff]
    %v748 = vpack.c.bf16 %v747, %v746
    %v749 = vld [vmem:[%s3] sm:$0xf]
    %v750 = vld [vmem:[%s3 + $0x4] sm:$0xf]
    %v751 = vld [vmem:[%s3 + $0x8] sm:$0xf]
    %v752 = vld [vmem:[%s3 + $0xc] sm:$0xf]
    %v753 = vld [vmem:[%s3 + $0x10] sm:$0xf]
    %v754 = vld [vmem:[%s3 + $0x14] sm:$0xf]
    %v755 = vld [vmem:[%s3 + $0x18] sm:$0xf]
    %v756 = vld [vmem:[%s3 + $0x1c] sm:$0xf]
    %v757 = vld [vmem:[%s3 + $0x20] sm:$0xf]
    %v758 = vld [vmem:[%s3 + $0x24] sm:$0xf]
    %v759 = vld [vmem:[%s3 + $0x28] sm:$0xf]
    %v760 = vld [vmem:[%s3 + $0x2c] sm:$0xf]
    %v761 = vld [vmem:[%s3 + $0x30] sm:$0xf]
    %v762 = vld [vmem:[%s3 + $0x34] sm:$0xf]
    %v763 = vld [vmem:[%s3 + $0x38] sm:$0xf]
    %v764 = vld [vmem:[%s3 + $0x3c] sm:$0xf]
    %v765 = vld [vmem:[%s4] sm:$0x1]
    %v767 = vlaneseq
    %v768 = vshrl.u32 %v767, 7
    %v769 = vsub.s32 0, %v768
    %v770 = vrot.slane %v765, %v769
    %v788 = vunpack.c.l.b16 %v749
    %v789 = vunpack.c.l.b16 %v750
    %v790 = vunpack.c.l.b16 %v751
    %v791 = vunpack.c.l.b16 %v752
    %v792 = vunpack.c.l.b16 %v753
    %v793 = vunpack.c.l.b16 %v754
    %v794 = vunpack.c.l.b16 %v755
    %v795 = vunpack.c.l.b16 %v756
    %v796 = vunpack.c.l.b16 %v757
    %v797 = vunpack.c.l.b16 %v758
    %v798 = vunpack.c.l.b16 %v759
    %v799 = vunpack.c.l.b16 %v760
    %v800 = vunpack.c.l.b16 %v761
    %v801 = vunpack.c.l.b16 %v762
    %v802 = vunpack.c.l.b16 %v763
    %v803 = vunpack.c.l.b16 %v764
    %v804 = vpack.c.b16 %v789, %v788
    %v805 = vpack.c.b16 %v791, %v790
    %v806 = vpack.c.b16 %v793, %v792
    %v807 = vpack.c.b16 %v795, %v794
    %v808 = vpack.c.b16 %v797, %v796
    %v809 = vpack.c.b16 %v799, %v798
    %v810 = vpack.c.b16 %v801, %v800
    %v811 = vpack.c.b16 %v803, %v802
    %820 = vmatprep.subr.bf16.mxu0 0
    %821 = vmatpush1.bf16.msra.mxu0 %v804
    %822 = vmatprep.subr.bf16.mxu0 0
    %823 = vmatpush1.bf16.msra.mxu0 %v805
    %824 = vmatprep.subr.bf16.mxu0 0
    %825 = vmatpush1.bf16.msra.mxu0 %v806
    %826 = vmatprep.subr.bf16.mxu0 0
    %827 = vmatpush1.bf16.msra.mxu0 %v807
    %828 = vmatprep.subr.bf16.mxu0 0
    %829 = vmatpush1.bf16.msra.mxu0 %v808
    %830 = vmatprep.subr.bf16.mxu0 0
    %831 = vmatpush1.bf16.msra.mxu0 %v809
    %832 = vmatprep.subr.bf16.mxu0 0
    %833 = vmatpush1.bf16.msra.mxu0 %v810
    %834 = vmatprep.subr.bf16.mxu0 0
    %835 = vmatpush1.bf16.msra.mxu0 %v811
    %836 = vmatprep.subr.bf16.mxu0 0
    %837 = vmatpush1.bf16.msra.mxu0 0
    %838 = vmatprep.subr.bf16.mxu0 0
    %839 = vmatpush1.bf16.msra.mxu0 0
    %840 = vmatprep.subr.bf16.mxu0 0
    %841 = vmatpush1.bf16.msra.mxu0 0
    %842 = vmatprep.subr.bf16.mxu0 0
    %843 = vmatpush1.bf16.msra.mxu0 0
    %844 = vmatprep.subr.bf16.mxu0 0
    %845 = vmatpush1.bf16.msra.mxu0 0
    %846 = vmatprep.subr.bf16.mxu0 0
    %847 = vmatpush1.bf16.msra.mxu0 0
    %848 = vmatprep.subr.bf16.mxu0 0
    %849 = vmatpush1.bf16.msra.mxu0 0
    %850 = vmatprep.subr.bf16.mxu0 0
    %851 = vmatpush1.bf16.msra.mxu0 0
    %852 = vmatprep.mubr.bf16.mxu0 0
    %853 = vmatmul.mubr.bf16.gmra.mrb[0].mxu0 %v748
    %v854 = vpop.f32.mrb[0].mxu0
    %v855 = vadd.f32 %v770, %v854
    %v856 = vpop.f32.mrb[0].mxu0
    %v857 = vpop.f32.mrb[0].mxu0
    %v858 = vadd.f32 %v770, %v857
    %v859 = vpop.f32.mrb[0].mxu0
    %860 = vdwg.mxu0
    %v861 = vmax.f32 %v855, 0.0
    %v862 = vmax.f32 %v858, 0.0
    %863 = vst [vmem:[%s5] sm:$0xff] %v861
    %864 = vst [vmem:[%s5 + $0x8] sm:$0xff] %v862
    %v865 = vld [vmem:[%s5] sm:$0xff]
    %v866 = vld [vmem:[%s5 + $0x8] sm:$0xff]
    %v867 = vpack.c.bf16 %v866, %v865
    %s868 = scalar_lea.vmem %s3, 64
    %v869 = vld [vmem:[%s868] sm:$0xf]
    %v870 = vld [vmem:[%s868 + $0x4] sm:$0xf]
    %v871 = vld [vmem:[%s868 + $0x8] sm:$0xf]
    %v872 = vld [vmem:[%s868 + $0xc] sm:$0xf]
    %v873 = vld [vmem:[%s868 + $0x10] sm:$0xf]
    %v874 = vld [vmem:[%s868 + $0x14] sm:$0xf]
    %v875 = vld [vmem:[%s868 + $0x18] sm:$0xf]
    %v876 = vld [vmem:[%s868 + $0x1c] sm:$0xf]
    %v877 = vld [vmem:[%s868 + $0x20] sm:$0xf]
    %v878 = vld [vmem:[%s868 + $0x24] sm:$0xf]
    %v879 = vld [vmem:[%s868 + $0x28] sm:$0xf]
    %v880 = vld [vmem:[%s868 + $0x2c] sm:$0xf]
    %v881 = vld [vmem:[%s868 + $0x30] sm:$0xf]
    %v882 = vld [vmem:[%s868 + $0x34] sm:$0xf]
    %v883 = vld [vmem:[%s868 + $0x38] sm:$0xf]
    %v884 = vld [vmem:[%s868 + $0x3c] sm:$0xf]
    %s885 = scalar_lea.vmem %s4, 1
    %v886 = vld [vmem:[%s885] sm:$0x1]
    %v888 = vlaneseq
    %v889 = vshrl.u32 %v888, 7
    %v890 = vsub.s32 0, %v889
    %v891 = vrot.slane %v886, %v890
    %v909 = vunpack.c.l.b16 %v869
    %v910 = vunpack.c.l.b16 %v870
    %v911 = vunpack.c.l.b16 %v871
    %v912 = vunpack.c.l.b16 %v872
    %v913 = vunpack.c.l.b16 %v873
    %v914 = vunpack.c.l.b16 %v874
    %v915 = vunpack.c.l.b16 %v875
    %v916 = vunpack.c.l.b16 %v876
    %v917 = vunpack.c.l.b16 %v877
    %v918 = vunpack.c.l.b16 %v878
    %v919 = vunpack.c.l.b16 %v879
    %v920 = vunpack.c.l.b16 %v880
    %v921 = vunpack.c.l.b16 %v881
    %v922 = vunpack.c.l.b16 %v882
    %v923 = vunpack.c.l.b16 %v883
    %v924 = vunpack.c.l.b16 %v884
    %v925 = vpack.c.b16 %v910, %v909
    %v926 = vpack.c.b16 %v912, %v911
    %v927 = vpack.c.b16 %v914, %v913
    %v928 = vpack.c.b16 %v916, %v915
    %v929 = vpack.c.b16 %v918, %v917
    %v930 = vpack.c.b16 %v920, %v919
    %v931 = vpack.c.b16 %v922, %v921
    %v932 = vpack.c.b16 %v924, %v923
    %941 = vmatprep.subr.bf16.mxu0 0
    %942 = vmatpush1.bf16.msra.mxu0 %v925
    %943 = vmatprep.subr.bf16.mxu0 0
    %944 = vmatpush1.bf16.msra.mxu0 %v926
    %945 = vmatprep.subr.bf16.mxu0 0
    %946 = vmatpush1.bf16.msra.mxu0 %v927
    %947 = vmatprep.subr.bf16.mxu0 0
    %948 = vmatpush1.bf16.msra.mxu0 %v928
    %949 = vmatprep.subr.bf16.mxu0 0
    %950 = vmatpush1.bf16.msra.mxu0 %v929
    %951 = vmatprep.subr.bf16.mxu0 0
    %952 = vmatpush1.bf16.msra.mxu0 %v930
    %953 = vmatprep.subr.bf16.mxu0 0
    %954 = vmatpush1.bf16.msra.mxu0 %v931
    %955 = vmatprep.subr.bf16.mxu0 0
    %956 = vmatpush1.bf16.msra.mxu0 %v932
    %957 = vmatprep.subr.bf16.mxu0 0
    %958 = vmatpush1.bf16.msra.mxu0 0
    %959 = vmatprep.subr.bf16.mxu0 0
    %960 = vmatpush1.bf16.msra.mxu0 0
    %961 = vmatprep.subr.bf16.mxu0 0
    %962 = vmatpush1.bf16.msra.mxu0 0
    %963 = vmatprep.subr.bf16.mxu0 0
    %964 = vmatpush1.bf16.msra.mxu0 0
    %965 = vmatprep.subr.bf16.mxu0 0
    %966 = vmatpush1.bf16.msra.mxu0 0
    %967 = vmatprep.subr.bf16.mxu0 0
    %968 = vmatpush1.bf16.msra.mxu0 0
    %969 = vmatprep.subr.bf16.mxu0 0
    %970 = vmatpush1.bf16.msra.mxu0 0
    %971 = vmatprep.subr.bf16.mxu0 0
    %972 = vmatpush1.bf16.msra.mxu0 0
    %973 = vmatprep.mubr.bf16.mxu0 0
    %974 = vmatmul.mubr.bf16.gmra.mrb[0].mxu0 %v867
    %v975 = vpop.f32.mrb[0].mxu0
    %v976 = vadd.f32 %v891, %v975
    %v977 = vpop.f32.mrb[0].mxu0
    %v978 = vpop.f32.mrb[0].mxu0
    %v979 = vadd.f32 %v891, %v978
    %v980 = vpop.f32.mrb[0].mxu0
    %981 = vdwg.mxu0
    %v982 = vmax.f32 %v976, 0.0
    %v983 = vmax.f32 %v979, 0.0
    %984 = vst [vmem:[%s5] sm:$0xff] %v982
    %985 = vst [vmem:[%s5 + $0x8] sm:$0xff] %v983
    %v986 = vld [vmem:[%s5] sm:$0xff]
    %v987 = vld [vmem:[%s5 + $0x8] sm:$0xff]
    %v988 = vpack.c.bf16 %v987, %v986
    %s989 = scalar_lea.vmem %s3, 128
    %v990 = vld [vmem:[%s989] sm:$0xf]
    %v991 = vld [vmem:[%s989 + $0x4] sm:$0xf]
    %v992 = vld [vmem:[%s989 + $0x8] sm:$0xf]
    %v993 = vld [vmem:[%s989 + $0xc] sm:$0xf]
    %v994 = vld [vmem:[%s989 + $0x10] sm:$0xf]
    %v995 = vld [vmem:[%s989 + $0x14] sm:$0xf]
    %v996 = vld [vmem:[%s989 + $0x18] sm:$0xf]
    %v997 = vld [vmem:[%s989 + $0x1c] sm:$0xf]
    %v998 = vld [vmem:[%s989 + $0x20] sm:$0xf]
    %v999 = vld [vmem:[%s989 + $0x24] sm:$0xf]
    %v1000 = vld [vmem:[%s989 + $0x28] sm:$0xf]
    %v1001 = vld [vmem:[%s989 + $0x2c] sm:$0xf]
    %v1002 = vld [vmem:[%s989 + $0x30] sm:$0xf]
    %v1003 = vld [vmem:[%s989 + $0x34] sm:$0xf]
    %v1004 = vld [vmem:[%s989 + $0x38] sm:$0xf]
    %v1005 = vld [vmem:[%s989 + $0x3c] sm:$0xf]
    %s1006 = scalar_lea.vmem %s4, 2
    %v1007 = vld [vmem:[%s1006] sm:$0x1]
    %v1009 = vlaneseq
    %v1010 = vshrl.u32 %v1009, 7
    %v1011 = vsub.s32 0, %v1010
    %v1012 = vrot.slane %v1007, %v1011
    %v1030 = vunpack.c.l.b16 %v990
    %v1031 = vunpack.c.l.b16 %v991
    %v1032 = vunpack.c.l.b16 %v992
    %v1033 = vunpack.c.l.b16 %v993
    %v1034 = vunpack.c.l.b16 %v994
    %v1035 = vunpack.c.l.b16 %v995
    %v1036 = vunpack.c.l.b16 %v996
    %v1037 = vunpack.c.l.b16 %v997
    %v1038 = vunpack.c.l.b16 %v998
    %v1039 = vunpack.c.l.b16 %v999
    %v1040 = vunpack.c.l.b16 %v1000
    %v1041 = vunpack.c.l.b16 %v1001
    %v1042 = vunpack.c.l.b16 %v1002
    %v1043 = vunpack.c.l.b16 %v1003
    %v1044 = vunpack.c.l.b16 %v1004
    %v1045 = vunpack.c.l.b16 %v1005
    %v1046 = vpack.c.b16 %v1031, %v1030
    %v1047 = vpack.c.b16 %v1033, %v1032
    %v1048 = vpack.c.b16 %v1035, %v1034
    %v1049 = vpack.c.b16 %v1037, %v1036
    %v1050 = vpack.c.b16 %v1039, %v1038
    %v1051 = vpack.c.b16 %v1041, %v1040
    %v1052 = vpack.c.b16 %v1043, %v1042
    %v1053 = vpack.c.b16 %v1045, %v1044
    %1062 = vmatprep.subr.bf16.mxu0 0
    %1063 = vmatpush1.bf16.msra.mxu0 %v1046
    %1064 = vmatprep.subr.bf16.mxu0 0
    %1065 = vmatpush1.bf16.msra.mxu0 %v1047
    %1066 = vmatprep.subr.bf16.mxu0 0
    %1067 = vmatpush1.bf16.msra.mxu0 %v1048
    %1068 = vmatprep.subr.bf16.mxu0 0
    %1069 = vmatpush1.bf16.msra.mxu0 %v1049
    %1070 = vmatprep.subr.bf16.mxu0 0
    %1071 = vmatpush1.bf16.msra.mxu0 %v1050
    %1072 = vmatprep.subr.bf16.mxu0 0
    %1073 = vmatpush1.bf16.msra.mxu0 %v1051
    %1074 = vmatprep.subr.bf16.mxu0 0
    %1075 = vmatpush1.bf16.msra.mxu0 %v1052
    %1076 = vmatprep.subr.bf16.mxu0 0
    %1077 = vmatpush1.bf16.msra.mxu0 %v1053
    %1078 = vmatprep.subr.bf16.mxu0 0
    %1079 = vmatpush1.bf16.msra.mxu0 0
    %1080 = vmatprep.subr.bf16.mxu0 0
    %1081 = vmatpush1.bf16.msra.mxu0 0
    %1082 = vmatprep.subr.bf16.mxu0 0
    %1083 = vmatpush1.bf16.msra.mxu0 0
    %1084 = vmatprep.subr.bf16.mxu0 0
    %1085 = vmatpush1.bf16.msra.mxu0 0
    %1086 = vmatprep.subr.bf16.mxu0 0
    %1087 = vmatpush1.bf16.msra.mxu0 0
    %1088 = vmatprep.subr.bf16.mxu0 0
    %1089 = vmatpush1.bf16.msra.mxu0 0
    %1090 = vmatprep.subr.bf16.mxu0 0
    %1091 = vmatpush1.bf16.msra.mxu0 0
    %1092 = vmatprep.subr.bf16.mxu0 0
    %1093 = vmatpush1.bf16.msra.mxu0 0
    %1094 = vmatprep.mubr.bf16.mxu0 0
    %1095 = vmatmul.mubr.bf16.gmra.mrb[0].mxu0 %v988
    %v1096 = vpop.f32.mrb[0].mxu0
    %v1097 = vadd.f32 %v1012, %v1096
    %v1098 = vpop.f32.mrb[0].mxu0
    %v1099 = vpop.f32.mrb[0].mxu0
    %v1100 = vadd.f32 %v1012, %v1099
    %v1101 = vpop.f32.mrb[0].mxu0
    %1102 = vdwg.mxu0
    %v1103 = vmax.f32 %v1097, 0.0
    %v1104 = vmax.f32 %v1100, 0.0
    %1105 = vst [vmem:[%s5] sm:$0xff] %v1103
    %1106 = vst [vmem:[%s5 + $0x8] sm:$0xff] %v1104
    // Predicated region
    $region26: #{_fcnet_forward.1} parent=1 // pred_check
      _
    $region27: #{_fcnet_forward.1} parent=1 // pred_check_branch
      %1108 = sbr.rel (0) target = $region29
    $region28: #{_fcnet_forward.1} parent=1 // pred_region
      _
    $region29: #{_fcnet_forward.1} parent=1 // pred_fallthru
      _
    // Predicated region
    $region30: #{_fcnet_forward.1} parent=1 // pred_check
      _
    $region31: #{_fcnet_forward.1} parent=1 // pred_check_branch
      %1110 = sbr.rel (0) target = $region33
    $region32: #{_fcnet_forward.1} parent=1 // pred_region
      _
    $region33: #{_fcnet_forward.1} parent=1 // pred_fallthru
      _
    %1111 = vsyncpa [#allocation3], 1

</llo_original>
